<compile_context>
chip_gen: v7x
topology: tpu7x:2x2x1
jax: 0.10.0
libtpu: 0.0.40
codegen_flags: <defaults>
</compile_context>

<pallas_src>
import jax
import jax.numpy as jnp
from jax import lax
from jax.experimental import pallas as pl
from jax.experimental.pallas import tpu as pltpu


def _round_up(x, m):
    return ((x + m - 1) // m) * m


def _vmem_capacity_bytes():
    """Physical VMEM per TensorCore; conservative fallback if query fails."""
    try:
        info = pltpu.get_tpu_info()
        cap = getattr(info, "vmem_capacity_bytes", None)
        if cap:
            return int(cap)
    except Exception:
        pass
    return 64 << 20  # v7x per-TC physical VMEM (smallest of the targets)


def _choose_tiling(N, S, c_in, c_out, c_all, io_itemsize, param_bytes, vmem_budget):
    """Pick (NB, TS, SUB): batch block, spatial tile (multiple of SUB), lane sub-tile."""
    # Lane sub-tile: keep the widest live f32 activation (c_max, SUB) near ~128 KiB.
    c_max = max(c_all)
    sub = (128 * 1024) // (4 * c_max)
    sub = max(128, (sub // 128) * 128)
    s_pad = _round_up(S, 128)
    sub = min(sub, s_pad)

    # Lane budget per grid step: double-buffered input+output blocks must fit
    # what is left of the VMEM budget after (double-buffered) weights/biases.
    avail = max(vmem_budget - 2 * param_bytes - (4 << 20), 4 << 20)
    bytes_per_lane = 2 * (c_in + c_out) * io_itemsize
    lane_budget = int(avail // bytes_per_lane)
    lane_budget = max(sub, min(lane_budget, 32768))

    s_one_block = _round_up(s_pad, sub)  # lanes covering one whole image, SUB-aligned
    if s_one_block <= lane_budget:
        ts = s_one_block
        nb = max(1, min(N, lane_budget // ts, 8))  # pack small images per grid step
    else:
        nb = 1
        ts = max(sub, min((lane_budget // sub) * sub, s_one_block))

    # Keep enough grid steps for pipelining / v7x's two TensorCores.
    def n_steps(nb_, ts_):
        return (-(-N // nb_)) * (-(-S // ts_))

    while n_steps(nb, ts) < 4 and (nb > 1 or ts > sub):
        if nb > 1:
            nb -= 1
        else:
            ts = max(sub, ((ts // 2) // sub) * sub)
    return nb, ts, sub


def _make_mlp_kernel(depth, nb, n_sub, sub, compute_dtype):
    """Kernel refs: (x, w1, b1, ..., w_depth, b_depth, out).

    x block: (NB, C_in, TS); out block: (NB, C_out, TS); weights (Co, Ci); bias (Co, 1).
    """
    cast_back = jnp.dtype(compute_dtype) != jnp.dtype(jnp.float32)

    def kernel(*refs):
        x_ref, o_ref = refs[0], refs[-1]
        p = refs[1:-1]

        def one_subtile(b, off):
            h = x_ref[b, :, pl.ds(off, sub)]              # (C_in, SUB), lane-dense
            if h.dtype != compute_dtype:
                h = h.astype(compute_dtype)
            for d in range(depth):
                w = p[2 * d][...]                          # (C_out_d, C_in_d)
                bias = p[2 * d + 1][...]                   # (C_out_d, 1), f32
                acc = jnp.dot(w, h, preferred_element_type=jnp.float32)
                acc = jnp.maximum(acc + bias, 0.0)         # bias + relu in f32
                h = acc.astype(compute_dtype) if (cast_back and d + 1 < depth) else acc
            o_ref[b, :, pl.ds(off, sub)] = h.astype(o_ref.dtype)

        for b in range(nb):                                # static, small batch block
            if n_sub == 1:
                one_subtile(b, 0)
            else:
                # fori_loop (not a Python loop) bounds the live activation range.
                def body(i, carry, b=b):
                    one_subtile(b, pl.multiple_of(i * sub, 128))
                    return carry
                lax.fori_loop(0, n_sub, body, 0)

    return kernel


def mlp_block_pallas(x, weights, biases):
    """x: (N, C_in, H, W) NCHW.
    weights[d]: (C_out_d, C_in_d, 1, 1) (PyTorch conv weight layout)
    biases[d]:  (C_out_d,)
    returns: (N, C_out_last, H, W)"""
    N, C_in, H, W = x.shape
    S = H * W
    depth = len(weights)
    C_out = int(weights[-1].shape[0])
    c_all = [C_in] + [int(w.shape[0]) for w in weights]

    compute_dtype = jnp.bfloat16 if x.dtype == jnp.bfloat16 else jnp.float32
    cd_size = jnp.dtype(compute_dtype).itemsize
    io_size = jnp.dtype(x.dtype).itemsize

    # Flatten params; weights in compute dtype, biases kept f32 (f32 bias+relu on all gens).
    params = []
    param_bytes = 0
    flops_per_pixel = 0
    for w, b in zip(weights, biases):
        co, ci = int(w.shape[0]), int(w.shape[1])
        params.append(jnp.asarray(w).reshape(co, ci).astype(compute_dtype))
        params.append(jnp.asarray(b).reshape(co, 1).astype(jnp.float32))
        param_bytes += co * ci * cd_size + co * 4
        flops_per_pixel += 2 * ci * co

    cap = _vmem_capacity_bytes()
    budget = (cap * 3) // 4                 # ~48 MiB on v7x, ~96 MiB on v5e/v6e
    NB, TS, SUB = _choose_tiling(N, S, C_in, C_out, c_all, io_size, param_bytes, budget)
    n_sub = TS // SUB

    x_rows = x.reshape(N, C_in, S)          # free reshape (NCHW is contiguous)

    in_specs = [pl.BlockSpec((NB, C_in, TS), lambda n, s: (n, 0, s))]
    for w in weights:
        co, ci = int(w.shape[0]), int(w.shape[1])
        in_specs.append(pl.BlockSpec((co, ci), lambda n, s: (0, 0)))
        in_specs.append(pl.BlockSpec((co, 1), lambda n, s: (0, 0)))

    grid = (pl.cdiv(N, NB), pl.cdiv(S, TS))

    tile_bytes = 2 * NB * TS * (C_in + C_out) * io_size + 2 * param_bytes
    vmem_limit = int(min((cap * 9) // 10, max(budget, tile_bytes + (8 << 20))))

    cost = pl.CostEstimate(
        flops=flops_per_pixel * N * S,
        transcendentals=0,
        bytes_accessed=N * S * (C_in + C_out) * io_size + param_bytes,
    )

    out_rows = pl.pallas_call(
        _make_mlp_kernel(depth, NB, n_sub, SUB, compute_dtype),
        out_shape=jax.ShapeDtypeStruct((N, C_out, S), x.dtype),
        grid_spec=pltpu.PrefetchScalarGridSpec(
            num_scalar_prefetch=0,
            grid=grid,
            in_specs=in_specs,
            out_specs=pl.BlockSpec((NB, C_out, TS), lambda n, s: (n, 0, s)),
        ),
        compiler_params=pltpu.CompilerParams(
            dimension_semantics=("parallel", "parallel"),
            vmem_limit_bytes=vmem_limit,
        ),
        cost_estimate=cost,
    )(x_rows, *params)

    return out_rows.reshape(N, C_out, H, W)


def _reference(x, weights, biases):
    out = x
    for w, b in zip(weights, biases):
        w2d = w.reshape(w.shape[0], w.shape[1])
        out = jnp.einsum("nchw,oc->nohw", out, w2d) + b[None, :, None, None]
        out = jnp.maximum(out, 0.0)
    return out


if __name__ == "__main__":
    key = jax.random.PRNGKey(0)

    # Small shapes consistent with MlpBlock usage.
    N, in_features, out_features, H, W = 2, 4, 16, 16, 16
    depth_of_mlp = 3

    keys = jax.random.split(key, 1 + 2 * depth_of_mlp)
    x = jax.random.normal(keys[0], (N, in_features, H, W), dtype=jnp.float32)

    # Deterministic parameter init (mimics Conv2d kaiming-uniform scale).
    weights, biases = [], []
    cin = in_features
    for d in range(depth_of_mlp):
        bound = 1.0 / (cin ** 0.5)
        w = jax.random.uniform(keys[1 + 2 * d], (out_features, cin, 1, 1),
                               jnp.float32, -bound, bound)
        b = jax.random.uniform(keys[2 + 2 * d], (out_features,),
                               jnp.float32, -bound, bound)
        weights.append(w)
        biases.append(b)
        cin = out_features

    out = mlp_block_pallas(x, weights, biases)
    out = jax.block_until_ready(out)

    ref = _reference(x, weights, biases)
    assert out.shape == (N, out_features, H, W)
    assert jnp.allclose(out, ref, atol=1e-5, rtol=1e-5)

    print("KERNEL_OK")
</pallas_src>

<mosaic_0001>
module attributes {stable_mosaic.version = 11 : i64} {
  func.func @kernel(%arg0: i32, %arg1: i32, %arg2: memref<1x4x256xf32, #tpu.memory_space<vmem>>, %arg3: memref<16x4xf32, #tpu.memory_space<vmem>>, %arg4: memref<16x1xf32, #tpu.memory_space<vmem>>, %arg5: memref<16x16xf32, #tpu.memory_space<vmem>>, %arg6: memref<16x1xf32, #tpu.memory_space<vmem>>, %arg7: memref<16x16xf32, #tpu.memory_space<vmem>>, %arg8: memref<16x1xf32, #tpu.memory_space<vmem>>, %arg9: memref<1x16x256xf32, #tpu.memory_space<vmem>>) attributes {dimension_semantics = [#tpu.dimension_semantics<parallel>, #tpu.dimension_semantics<parallel>], iteration_bounds = array<i64: 2, 1>, scalar_prefetch = 0 : i64, scratch_operands = 0 : i64, tpu.core_type = #tpu.core_type<tc>, window_params = [{transform_indices = @transform_0, window_bounds = array<i64: 1, 4, 256>}, {pipeline_mode = #tpu.pipeline_mode<synchronous>, transform_indices = @transform_1, window_bounds = array<i64: 16, 4>}, {pipeline_mode = #tpu.pipeline_mode<synchronous>, transform_indices = @transform_2, window_bounds = array<i64: 16, 1>}, {pipeline_mode = #tpu.pipeline_mode<synchronous>, transform_indices = @transform_3, window_bounds = array<i64: 16, 16>}, {pipeline_mode = #tpu.pipeline_mode<synchronous>, transform_indices = @transform_4, window_bounds = array<i64: 16, 1>}, {pipeline_mode = #tpu.pipeline_mode<synchronous>, transform_indices = @transform_5, window_bounds = array<i64: 16, 16>}, {pipeline_mode = #tpu.pipeline_mode<synchronous>, transform_indices = @transform_6, window_bounds = array<i64: 16, 1>}, {transform_indices = @transform_7, window_bounds = array<i64: 1, 16, 256>}]} {
    %c0 = arith.constant 0 : index
    %c0_0 = arith.constant 0 : index
    %c0_1 = arith.constant 0 : index
    %0 = vector.load %arg2[%c0, %c0_0, %c0_1] : memref<1x4x256xf32, #tpu.memory_space<vmem>>, vector<1x4x256xf32>
    %1 = vector.shape_cast %0 : vector<1x4x256xf32> to vector<4x256xf32>
    %c0_2 = arith.constant 0 : index
    %c0_3 = arith.constant 0 : index
    %2 = vector.load %arg3[%c0_2, %c0_3] : memref<16x4xf32, #tpu.memory_space<vmem>>, vector<16x4xf32>
    %c0_4 = arith.constant 0 : index
    %c0_5 = arith.constant 0 : index
    %3 = vector.load %arg4[%c0_4, %c0_5] : memref<16x1xf32, #tpu.memory_space<vmem>>, vector<16x1xf32>
    %cst = arith.constant dense<0.000000e+00> : vector<16x256xf32>
    %4 = tpu.matmul %2, %1, %cst {dimension_numbers = #tpu.dot_dimension_numbers<[1], [0], [0], [1], [0, 0, 1, 1], [], []>} : vector<16x4xf32>, vector<4x256xf32>, vector<16x256xf32> -> vector<16x256xf32>
    %5 = vector.broadcast %3 : vector<16x1xf32> to vector<16x256xf32>
    %6 = arith.addf %4, %5 : vector<16x256xf32>
    %cst_6 = arith.constant 0.000000e+00 : f32
    %7 = vector.broadcast %cst_6 : f32 to vector<16x256xf32>
    %8 = arith.maximumf %6, %7 : vector<16x256xf32>
    %c0_7 = arith.constant 0 : index
    %c0_8 = arith.constant 0 : index
    %9 = vector.load %arg5[%c0_7, %c0_8] : memref<16x16xf32, #tpu.memory_space<vmem>>, vector<16x16xf32>
    %c0_9 = arith.constant 0 : index
    %c0_10 = arith.constant 0 : index
    %10 = vector.load %arg6[%c0_9, %c0_10] : memref<16x1xf32, #tpu.memory_space<vmem>>, vector<16x1xf32>
    %cst_11 = arith.constant dense<0.000000e+00> : vector<16x256xf32>
    %11 = tpu.matmul %9, %8, %cst_11 {dimension_numbers = #tpu.dot_dimension_numbers<[1], [0], [0], [1], [0, 0, 1, 1], [], []>} : vector<16x16xf32>, vector<16x256xf32>, vector<16x256xf32> -> vector<16x256xf32>
    %12 = vector.broadcast %10 : vector<16x1xf32> to vector<16x256xf32>
    %13 = arith.addf %11, %12 : vector<16x256xf32>
    %cst_12 = arith.constant 0.000000e+00 : f32
    %14 = vector.broadcast %cst_12 : f32 to vector<16x256xf32>
    %15 = arith.maximumf %13, %14 : vector<16x256xf32>
    %c0_13 = arith.constant 0 : index
    %c0_14 = arith.constant 0 : index
    %16 = vector.load %arg7[%c0_13, %c0_14] : memref<16x16xf32, #tpu.memory_space<vmem>>, vector<16x16xf32>
    %c0_15 = arith.constant 0 : index
    %c0_16 = arith.constant 0 : index
    %17 = vector.load %arg8[%c0_15, %c0_16] : memref<16x1xf32, #tpu.memory_space<vmem>>, vector<16x1xf32>
    %cst_17 = arith.constant dense<0.000000e+00> : vector<16x256xf32>
    %18 = tpu.matmul %16, %15, %cst_17 {dimension_numbers = #tpu.dot_dimension_numbers<[1], [0], [0], [1], [0, 0, 1, 1], [], []>} : vector<16x16xf32>, vector<16x256xf32>, vector<16x256xf32> -> vector<16x256xf32>
    %19 = vector.broadcast %17 : vector<16x1xf32> to vector<16x256xf32>
    %20 = arith.addf %18, %19 : vector<16x256xf32>
    %cst_18 = arith.constant 0.000000e+00 : f32
    %21 = vector.broadcast %cst_18 : f32 to vector<16x256xf32>
    %22 = arith.maximumf %20, %21 : vector<16x256xf32>
    %c0_19 = arith.constant 0 : index
    %c0_20 = arith.constant 0 : index
    %c0_21 = arith.constant 0 : index
    %23 = vector.load %arg9[%c0_19, %c0_20, %c0_21] : memref<1x16x256xf32, #tpu.memory_space<vmem>>, vector<1x16x256xf32>
    %24 = vector.shape_cast %23 : vector<1x16x256xf32> to vector<16x256xf32>
    %25 = vector.shape_cast %22 : vector<16x256xf32> to vector<1x16x256xf32>
    tpu.vector_store %arg9[%c0_19, %c0_20, %c0_21], %25 {strides = array<i32>} : memref<1x16x256xf32, #tpu.memory_space<vmem>>, vector<1x16x256xf32>,
    return
  }
  func.func @transform_0(%arg0: i32, %arg1: i32) -> (i32, i32, i32) {
    %c0_i32 = arith.constant 0 : i32
    %c0_i32_0 = arith.constant 0 : i32
    return %arg0, %c0_i32, %arg1 : i32, i32, i32
  }
  func.func @transform_1(%arg0: i32, %arg1: i32) -> (i32, i32) {
    %c0_i32 = arith.constant 0 : i32
    %c0_i32_0 = arith.constant 0 : i32
    %c0_i32_1 = arith.constant 0 : i32
    return %c0_i32, %c0_i32_0 : i32, i32
  }
  func.func @transform_2(%arg0: i32, %arg1: i32) -> (i32, i32) {
    %c0_i32 = arith.constant 0 : i32
    %c0_i32_0 = arith.constant 0 : i32
    %c0_i32_1 = arith.constant 0 : i32
    return %c0_i32, %c0_i32_0 : i32, i32
  }
  func.func @transform_3(%arg0: i32, %arg1: i32) -> (i32, i32) {
    %c0_i32 = arith.constant 0 : i32
    %c0_i32_0 = arith.constant 0 : i32
    %c0_i32_1 = arith.constant 0 : i32
    return %c0_i32, %c0_i32_0 : i32, i32
  }
  func.func @transform_4(%arg0: i32, %arg1: i32) -> (i32, i32) {
    %c0_i32 = arith.constant 0 : i32
    %c0_i32_0 = arith.constant 0 : i32
    %c0_i32_1 = arith.constant 0 : i32
    return %c0_i32, %c0_i32_0 : i32, i32
  }
  func.func @transform_5(%arg0: i32, %arg1: i32) -> (i32, i32) {
    %c0_i32 = arith.constant 0 : i32
    %c0_i32_0 = arith.constant 0 : i32
    %c0_i32_1 = arith.constant 0 : i32
    return %c0_i32, %c0_i32_0 : i32, i32
  }
  func.func @transform_6(%arg0: i32, %arg1: i32) -> (i32, i32) {
    %c0_i32 = arith.constant 0 : i32
    %c0_i32_0 = arith.constant 0 : i32
    %c0_i32_1 = arith.constant 0 : i32
    return %c0_i32, %c0_i32_0 : i32, i32
  }
  func.func @transform_7(%arg0: i32, %arg1: i32) -> (i32, i32, i32) {
    %c0_i32 = arith.constant 0 : i32
    %c0_i32_0 = arith.constant 0 : i32
    return %arg0, %c0_i32, %arg1 : i32, i32, i32
  }
}

</mosaic_0001>

<llo_original>
// kernel: tpu_custom_call.1
$region0: #{tpu_custom_call.1}
  #allocation0 [shape = 'u32[]', space=smem, size = 0x4, offset = 0x4, fixed_abs, tag = 'smem constant byte address 0x4 - core index']
  #allocation1 [shape = 'u32[144,128]{1,0:T(1,128)}', space=vmem, size = 0x12000, scoped, tag = 'internal scratch']
  %s0 = inlined_call_operand.vmem [shape: f32[2,4,256], index: 0, kind: input, shape index: {}]
  %s1 = inlined_call_operand.vmem [shape: f32[16,4], index: 1, kind: input, shape index: {}]
  %s2 = inlined_call_operand.vmem [shape: f32[16,1], index: 2, kind: input, shape index: {}]
  %s3 = inlined_call_operand.vmem [shape: f32[16,16], index: 3, kind: input, shape index: {}]
  %s4 = inlined_call_operand.vmem [shape: f32[16,1], index: 4, kind: input, shape index: {}]
  %s5 = inlined_call_operand.vmem [shape: f32[16,16], index: 5, kind: input, shape index: {}]
  %s6 = inlined_call_operand.vmem [shape: f32[16,1], index: 6, kind: input, shape index: {}]
  %s7 = inlined_call_operand.hbm [shape: f32[2,16,256], index: 7, kind: output, shape index: {}]
  %s8 = sld [smem:[#allocation0]]
  $region61: #{tpu_custom_call.1} parent=0
    _
  %s10 = ssub.s32 1, %s8
  %s11 = scalar_select 0, %s10, %s8
  $region1: #{tpu_custom_call.1} parent=0
    #allocation2 [shape = 'u8[32768]{0}', space=vmem, size = 0x8000, scoped, tag = 'output window, operand 0']
    #allocation3 [shape = 's32[2]{0}', space=sflag, size = 0x8, scoped, tag = 'scoped memory for tpu_custom_call.1']
    %12 = vsyncpa [#allocation3], 0
    %s13 = scalar_lea.sflag [#allocation3], 1
    %14 = vsyncpa %s13, 0
    loop: start=0, step=1, limit=4
    $region2: #{tpu_custom_call.1} parent=1 // loop_pre_header
      _
    $region3: #{tpu_custom_call.1} parent=1 // loop_header
      %s16 = sphi 0, %s20
      %p17 = scmp.ge.s32.totalorder %s16, 4
      %s23 = sphi 0, %s35
      %s24 = sphi 0, %s31
      %s25 = sphi 0, %s23
      %s26 = sphi 0, %s24
      %s27 = sphi 0, %s25
      %s28 = sphi 0, %s26
      %s40 = sphi 0, %s42
      %s43 = sphi 0, %s40
      %s44 = sphi 0, %s43
      %s60 = sphi 0, %s44
      %s64 = sphi 0, %s64
      %s66 = sphi 0, %s64
      %s67 = sphi 0, %s66
      %s81 = sphi 0, %s67
      %s85 = sphi 0, %s85
      %s87 = sphi 0, %s85
      %s88 = sphi 0, %s87
      %s102 = sphi 0, %s88
      %s106 = sphi 0, %s106
      %s108 = sphi 0, %s106
      %s109 = sphi 0, %s108
      %s123 = sphi 0, %s109
      %s127 = sphi 0, %s127
      %s129 = sphi 0, %s127
      %s130 = sphi 0, %s129
      %s144 = sphi 0, %s130
      %s148 = sphi 0, %s148
      %s150 = sphi 0, %s148
      %s151 = sphi 0, %s150
      %s165 = sphi 0, %s151
      %s169 = sphi 0, %s169
      %s171 = sphi 0, %s169
      %s172 = sphi 0, %s171
      %s186 = sphi 0, %s172
      %s194 = sphi 0, %s196
      %s197 = sphi 0, %s194
      %s198 = sphi 0, %s197
      %s214 = sphi 0, %s198
    $region4: #{tpu_custom_call.1} parent=1 // loop_header_branch
      %19 = sbr.rel (%p17) target = $region8
    $region5: #{tpu_custom_call.1} parent=1 // loop_body
      %s21 = ssub.s32 %s16, 1
      %s22 = ssub.s32 %s16, 2
      %s29 = sadd.s32 1, %s24
      %p30 = scmp.ge.s32.totalorder %s29, 1
      %s31 = scalar_select %p30, 0, %s29
      %s32 = sadd.s32 1, %s23
      %s33 = scalar_select %p30, %s32, %s23
      %p34 = scmp.ge.s32.totalorder %s33, 2
      %s35 = scalar_select %p34, 0, %s33
      %s36 = ssub.s32 %s23, %s35
      %s37 = ssub.s32 %s24, %s31
      %s38 = sor.u32 %s36, %s37
      %p39 = scmp.eq.s32.totalorder %s38, 0
      %s41 = sadd.s32 %s40, 1
      %s42 = scalar_select %p39, %s40, %s41
      %p45 = pneg %p39
      %p46 = scmp.eq.s32.totalorder %s16, 1
      %p47 = por %p45, %p46
      %p48 = scmp.ne.s32.totalorder %s40, %s43
      %p49 = scmp.eq.s32.totalorder %s16, 0
      %p50 = por %p48, %p49
      %p51 = scmp.ne.s32.totalorder %s40, %s43
      %p52 = scmp.eq.s32.totalorder %s21, 1
      %p53 = por %p51, %p52
      %p54 = scmp.ne.s32.totalorder %s43, %s44
      %p55 = scmp.eq.s32.totalorder %s21, 0
      %p56 = por %p54, %p55
      %p57 = scmp.ne.s32.totalorder %s43, %s44
      %p58 = scmp.eq.s32.totalorder %s22, 1
      %p59 = por %p57, %p58
      %p61 = scmp.ne.s32.totalorder %s44, %s60
      %p62 = scmp.eq.s32.totalorder %s22, 0
      %p63 = por %p61, %p62
      %s65 = sadd.s32 %s64, 1
      %p68 = scmp.eq.s32.totalorder %s16, 1
      %p69 = scmp.ne.s32.totalorder %s64, %s66
      %p70 = scmp.eq.s32.totalorder %s16, 0
      %p71 = por %p69, %p70
      %p72 = scmp.ne.s32.totalorder %s64, %s66
      %p73 = scmp.eq.s32.totalorder %s21, 1
      %p74 = por %p72, %p73
      %p75 = scmp.ne.s32.totalorder %s66, %s67
      %p76 = scmp.eq.s32.totalorder %s21, 0
      %p77 = por %p75, %p76
      %p78 = scmp.ne.s32.totalorder %s66, %s67
      %p79 = scmp.eq.s32.totalorder %s22, 1
      %p80 = por %p78, %p79
      %p82 = scmp.ne.s32.totalorder %s67, %s81
      %p83 = scmp.eq.s32.totalorder %s22, 0
      %p84 = por %p82, %p83
      %s86 = sadd.s32 %s85, 1
      %p89 = scmp.eq.s32.totalorder %s16, 1
      %p90 = scmp.ne.s32.totalorder %s85, %s87
      %p91 = scmp.eq.s32.totalorder %s16, 0
      %p92 = por %p90, %p91
      %p93 = scmp.ne.s32.totalorder %s85, %s87
      %p94 = scmp.eq.s32.totalorder %s21, 1
      %p95 = por %p93, %p94
      %p96 = scmp.ne.s32.totalorder %s87, %s88
      %p97 = scmp.eq.s32.totalorder %s21, 0
      %p98 = por %p96, %p97
      %p99 = scmp.ne.s32.totalorder %s87, %s88
      %p100 = scmp.eq.s32.totalorder %s22, 1
      %p101 = por %p99, %p100
      %p103 = scmp.ne.s32.totalorder %s88, %s102
      %p104 = scmp.eq.s32.totalorder %s22, 0
      %p105 = por %p103, %p104
      %s107 = sadd.s32 %s106, 1
      %p110 = scmp.eq.s32.totalorder %s16, 1
      %p111 = scmp.ne.s32.totalorder %s106, %s108
      %p112 = scmp.eq.s32.totalorder %s16, 0
      %p113 = por %p111, %p112
      %p114 = scmp.ne.s32.totalorder %s106, %s108
      %p115 = scmp.eq.s32.totalorder %s21, 1
      %p116 = por %p114, %p115
      %p117 = scmp.ne.s32.totalorder %s108, %s109
      %p118 = scmp.eq.s32.totalorder %s21, 0
      %p119 = por %p117, %p118
      %p120 = scmp.ne.s32.totalorder %s108, %s109
      %p121 = scmp.eq.s32.totalorder %s22, 1
      %p122 = por %p120, %p121
      %p124 = scmp.ne.s32.totalorder %s109, %s123
      %p125 = scmp.eq.s32.totalorder %s22, 0
      %p126 = por %p124, %p125
      %s128 = sadd.s32 %s127, 1
      %p131 = scmp.eq.s32.totalorder %s16, 1
      %p132 = scmp.ne.s32.totalorder %s127, %s129
      %p133 = scmp.eq.s32.totalorder %s16, 0
      %p134 = por %p132, %p133
      %p135 = scmp.ne.s32.totalorder %s127, %s129
      %p136 = scmp.eq.s32.totalorder %s21, 1
      %p137 = por %p135, %p136
      %p138 = scmp.ne.s32.totalorder %s129, %s130
      %p139 = scmp.eq.s32.totalorder %s21, 0
      %p140 = por %p138, %p139
      %p141 = scmp.ne.s32.totalorder %s129, %s130
      %p142 = scmp.eq.s32.totalorder %s22, 1
      %p143 = por %p141, %p142
      %p145 = scmp.ne.s32.totalorder %s130, %s144
      %p146 = scmp.eq.s32.totalorder %s22, 0
      %p147 = por %p145, %p146
      %s149 = sadd.s32 %s148, 1
      %p152 = scmp.eq.s32.totalorder %s16, 1
      %p153 = scmp.ne.s32.totalorder %s148, %s150
      %p154 = scmp.eq.s32.totalorder %s16, 0
      %p155 = por %p153, %p154
      %p156 = scmp.ne.s32.totalorder %s148, %s150
      %p157 = scmp.eq.s32.totalorder %s21, 1
      %p158 = por %p156, %p157
      %p159 = scmp.ne.s32.totalorder %s150, %s151
      %p160 = scmp.eq.s32.totalorder %s21, 0
      %p161 = por %p159, %p160
      %p162 = scmp.ne.s32.totalorder %s150, %s151
      %p163 = scmp.eq.s32.totalorder %s22, 1
      %p164 = por %p162, %p163
      %p166 = scmp.ne.s32.totalorder %s151, %s165
      %p167 = scmp.eq.s32.totalorder %s22, 0
      %p168 = por %p166, %p167
      %s170 = sadd.s32 %s169, 1
      %p173 = scmp.eq.s32.totalorder %s16, 1
      %p174 = scmp.ne.s32.totalorder %s169, %s171
      %p175 = scmp.eq.s32.totalorder %s16, 0
      %p176 = por %p174, %p175
      %p177 = scmp.ne.s32.totalorder %s169, %s171
      %p178 = scmp.eq.s32.totalorder %s21, 1
      %p179 = por %p177, %p178
      %p180 = scmp.ne.s32.totalorder %s171, %s172
      %p181 = scmp.eq.s32.totalorder %s21, 0
      %p182 = por %p180, %p181
      %p183 = scmp.ne.s32.totalorder %s171, %s172
      %p184 = scmp.eq.s32.totalorder %s22, 1
      %p185 = por %p183, %p184
      %p187 = scmp.ne.s32.totalorder %s172, %s186
      %p188 = scmp.eq.s32.totalorder %s22, 0
      %p189 = por %p187, %p188
      %s190 = ssub.s32 %s23, %s35
      %s191 = ssub.s32 %s24, %s31
      %s192 = sor.u32 %s190, %s191
      %p193 = scmp.eq.s32.totalorder %s192, 0
      %s195 = sadd.s32 %s194, 1
      %s196 = scalar_select %p193, %s194, %s195
      %p199 = pneg %p193
      %p200 = scmp.eq.s32.totalorder %s16, 1
      %p201 = por %p199, %p200
      %p202 = scmp.ne.s32.totalorder %s194, %s197
      %p203 = scmp.eq.s32.totalorder %s16, 0
      %p204 = por %p202, %p203
      %p205 = scmp.ne.s32.totalorder %s194, %s197
      %p206 = scmp.eq.s32.totalorder %s21, 1
      %p207 = por %p205, %p206
      %p208 = scmp.ne.s32.totalorder %s197, %s198
      %p209 = scmp.eq.s32.totalorder %s21, 0
      %p210 = por %p208, %p209
      %p211 = scmp.ne.s32.totalorder %s197, %s198
      %p212 = scmp.eq.s32.totalorder %s22, 1
      %p213 = por %p211, %p212
      %p215 = scmp.ne.s32.totalorder %s198, %s214
      %p216 = scmp.eq.s32.totalorder %s22, 0
      %p217 = por %p215, %p216
      %p218 = scmp.le.s32.totalorder 1, %s16
      %p219 = scmp.lt.s32.totalorder %s16, 3
      %p220 = pnand %p218, %p219
      %p221 = pneg %p220
      // Predicated region
      $region9: #{tpu_custom_call.1} parent=5 // pred_check
        _
      $region10: #{tpu_custom_call.1} parent=5 // pred_check_branch
        %223 = sbr.rel (%p220) target = $region12
      $region11: #{tpu_custom_call.1} parent=5 // pred_region
        %s224 = ssub.s32 %s16, 1
        // Predicated region
        $region13: #{tpu_custom_call.1} parent=11 // pred_check
          %p225 = pneg %p77
        $region14: #{tpu_custom_call.1} parent=11 // pred_check_branch
          %227 = sbr.rel (%p225) target = $region16
        $region15: #{tpu_custom_call.1} parent=11 // pred_region
          _
        $region16: #{tpu_custom_call.1} parent=11 // pred_fallthru
          _
        // Predicated region
        $region17: #{tpu_custom_call.1} parent=11 // pred_check
          %p228 = pneg %p98
        $region18: #{tpu_custom_call.1} parent=11 // pred_check_branch
          %230 = sbr.rel (%p228) target = $region20
        $region19: #{tpu_custom_call.1} parent=11 // pred_region
          _
        $region20: #{tpu_custom_call.1} parent=11 // pred_fallthru
          _
        // Predicated region
        $region21: #{tpu_custom_call.1} parent=11 // pred_check
          %p231 = pneg %p119
        $region22: #{tpu_custom_call.1} parent=11 // pred_check_branch
          %233 = sbr.rel (%p231) target = $region24
        $region23: #{tpu_custom_call.1} parent=11 // pred_region
          _
        $region24: #{tpu_custom_call.1} parent=11 // pred_fallthru
          _
        // Predicated region
        $region25: #{tpu_custom_call.1} parent=11 // pred_check
          %p234 = pneg %p140
        $region26: #{tpu_custom_call.1} parent=11 // pred_check_branch
          %236 = sbr.rel (%p234) target = $region28
        $region27: #{tpu_custom_call.1} parent=11 // pred_region
          _
        $region28: #{tpu_custom_call.1} parent=11 // pred_fallthru
          _
        // Predicated region
        $region29: #{tpu_custom_call.1} parent=11 // pred_check
          %p237 = pneg %p161
        $region30: #{tpu_custom_call.1} parent=11 // pred_check_branch
          %239 = sbr.rel (%p237) target = $region32
        $region31: #{tpu_custom_call.1} parent=11 // pred_region
          _
        $region32: #{tpu_custom_call.1} parent=11 // pred_fallthru
          _
        // Predicated region
        $region33: #{tpu_custom_call.1} parent=11 // pred_check
          %p240 = pneg %p182
        $region34: #{tpu_custom_call.1} parent=11 // pred_check_branch
          %242 = sbr.rel (%p240) target = $region36
        $region35: #{tpu_custom_call.1} parent=11 // pred_region
          _
        $region36: #{tpu_custom_call.1} parent=11 // pred_fallthru
          _
      $region12: #{tpu_custom_call.1} parent=5 // pred_fallthru
        _
      %p243 = scmp.lt.s32.totalorder %s16, 2
      // Predicated region
      $region37: #{tpu_custom_call.1} parent=5 // pred_check
        %p244 = pneg %p243
      $region38: #{tpu_custom_call.1} parent=5 // pred_check_branch
        %246 = sbr.rel (%p244) target = $region40
      $region39: #{tpu_custom_call.1} parent=5 // pred_region
        // Predicated region
        $region41: #{tpu_custom_call.1} parent=39 // pred_check
          %p247 = pneg %p50
        $region42: #{tpu_custom_call.1} parent=39 // pred_check_branch
          %249 = sbr.rel (%p247) target = $region44
        $region43: #{tpu_custom_call.1} parent=39 // pred_region
          %s250 = smul.u32 2, %s24
          %p251 = scmp.lt.s32.totalorder %s23, 1
          %s252 = scalar_select %p251, %s23, 1
          %p253 = scmp.lt.s32.totalorder %s250, 1
          %s254 = scalar_select %p253, %s250, 1
          %s255 = smul.addr %s252, 2
          %s256 = sadd.s32 %s254, %s255
          %s257 = smul.addr %s256, 4
          %s258 = scalar_lea.vmem %s0, %s257
          %s259 = smul.u32 2, %s24
        $region44: #{tpu_custom_call.1} parent=39 // pred_fallthru
          _
      $region40: #{tpu_custom_call.1} parent=5 // pred_fallthru
        _
      %p260 = scmp.le.s32.totalorder 1, %s16
      %p261 = scmp.lt.s32.totalorder %s16, 3
      %p262 = pnand %p260, %p261
      %p263 = pneg %p262
      // Predicated region
      $region45: #{tpu_custom_call.1} parent=5 // pred_check
        _
      $region46: #{tpu_custom_call.1} parent=5 // pred_check_branch
        %265 = sbr.rel (%p262) target = $region48
      $region47: #{tpu_custom_call.1} parent=5 // pred_region
        %s266 = ssub.s32 %s16, 1
        %s267 = smul.u32 2, %s26
        %p268 = scmp.lt.s32.totalorder %s25, 1
        %s269 = scalar_select %p268, %s25, 1
        %p270 = scmp.lt.s32.totalorder %s267, 1
        %s271 = scalar_select %p270, %s267, 1
        %s272 = smul.addr %s269, 2
        %s273 = sadd.s32 %s271, %s272
        %s274 = smul.addr %s273, 4
        %s275 = scalar_lea.vmem %s0, %s274
        %p276 = pneg %p56
        %p277 = pneg %p53
        %p278 = pneg %p77
        %p279 = pneg %p74
        %p280 = pneg %p98
        %p281 = pneg %p95
        %p282 = pneg %p119
        %p283 = pneg %p116
        %p284 = pneg %p140
        %p285 = pneg %p137
        %p286 = pneg %p161
        %p287 = pneg %p158
        %p288 = pneg %p182
        %p289 = pneg %p179
        %p290 = pneg %p210
        %p291 = pneg %p207
        %s292 = sand.u32 %s197, 1
        %s293 = scalar_lea.sflag [#allocation3], %s292
        %s294 = sand.u32 %s197, 1
        %s295 = smul.addr %s294, 32
        %s296 = scalar_lea.vmem [#allocation2], %s295
        %s297 = smul.u32 2, %s26
        %p298 = scmp.lt.s32.totalorder %s25, 1
        %s299 = scalar_select %p298, %s25, 1
        %p300 = scmp.lt.s32.totalorder %s297, 1
        %s301 = scalar_select %p300, %s297, 1
        %s302 = smul.addr %s299, 2
        %s303 = sadd.s32 %s301, %s302
        %s304 = smul.addr %s303, 4
        %s305 = scalar_lea.vmem %s0, %s304
        %s306 = smul.u32 2, %s26
        %s307 = smul.u32 2, %s26
        %v308 = vld [vmem:[%s305] sm:$0xff]
        %v309 = vld [vmem:[%s1] sm:$0xff]
        %v310 = vld [vmem:[%s1 + $0x8] sm:$0xff]
        %v311 = vld [vmem:[%s2] sm:$0xff]
        %v312 = vld [vmem:[%s2 + $0x8] sm:$0xff]
        %314 = vset.pattern.permute.xlu0 0
        %315 = vperm.xlu0 %314, %v311
        %v316 = vpop.permute.xlu0 %315
        %319 = vset.pattern.permute.xlu0 0
        %320 = vperm.xlu0 %319, %v312
        %v321 = vpop.permute.xlu0 %320
        %v324 = vcombine.high %v308, %v308
        %vm325 = vcmask 31744
        %v327 = vsel %vm325, %v309, 0
        %v330 = vsel %vm325, %v310, 0
        %vm332 = vcmask 1043456
        %v333 = vsel %vm332, %v308, 0
        %v335 = vsel %vm332, %v324, 0
        %337 = vmatprep.subr.mxu0 %v335
        %338 = vmatpush1.msra.mxu0 %v333
        %339 = vmatprep.subr.mxu0 0.0
        %340 = vmatpush1.msra.mxu0 0.0
        %341 = vmatprep.subr.mxu0 0.0
        %342 = vmatpush1.msra.mxu0 0.0
        %343 = vmatprep.subr.mxu0 0.0
        %344 = vmatpush1.msra.mxu0 0.0
        %345 = vmatprep.subr.mxu0 0.0
        %346 = vmatpush1.msra.mxu0 0.0
        %347 = vmatprep.subr.mxu0 0.0
        %348 = vmatpush1.msra.mxu0 0.0
        %349 = vmatprep.subr.mxu0 0.0
        %350 = vmatpush1.msra.mxu0 0.0
        %351 = vmatprep.subr.mxu0 0.0
        %352 = vmatpush1.msra.mxu0 0.0
        %353 = vmatprep.subr.mxu0 0.0
        %354 = vmatpush1.msra.mxu0 0.0
        %355 = vmatprep.subr.mxu0 0.0
        %356 = vmatpush1.msra.mxu0 0.0
        %357 = vmatprep.subr.mxu0 0.0
        %358 = vmatpush1.msra.mxu0 0.0
        %359 = vmatprep.subr.mxu0 0.0
        %360 = vmatpush1.msra.mxu0 0.0
        %361 = vmatprep.subr.mxu0 0.0
        %362 = vmatpush1.msra.mxu0 0.0
        %363 = vmatprep.subr.mxu0 0.0
        %364 = vmatpush1.msra.mxu0 0.0
        %365 = vmatprep.subr.mxu0 0.0
        %366 = vmatpush1.msra.mxu0 0.0
        %367 = vmatprep.subr.mxu0 0.0
        %368 = vmatpush1.msra.mxu0 0.0
        %369 = vmatprep.subr.mxu0 0.0
        %370 = vmatpush1.msra.mxu0 0.0
        %371 = vmatprep.subr.mxu0 0.0
        %372 = vmatpush1.msra.mxu0 0.0
        %373 = vmatprep.subr.mxu0 0.0
        %374 = vmatpush1.msra.mxu0 0.0
        %375 = vmatprep.subr.mxu0 0.0
        %376 = vmatpush1.msra.mxu0 0.0
        %377 = vmatprep.subr.mxu0 0.0
        %378 = vmatpush1.msra.mxu0 0.0
        %379 = vmatprep.subr.mxu0 0.0
        %380 = vmatpush1.msra.mxu0 0.0
        %381 = vmatprep.subr.mxu0 0.0
        %382 = vmatpush1.msra.mxu0 0.0
        %383 = vmatprep.subr.mxu0 0.0
        %384 = vmatpush1.msra.mxu0 0.0
        %385 = vmatprep.subr.mxu0 0.0
        %386 = vmatpush1.msra.mxu0 0.0
        %387 = vmatprep.subr.mxu0 0.0
        %388 = vmatpush1.msra.mxu0 0.0
        %389 = vmatprep.subr.mxu0 0.0
        %390 = vmatpush1.msra.mxu0 0.0
        %391 = vmatprep.subr.mxu0 0.0
        %392 = vmatpush1.msra.mxu0 0.0
        %393 = vmatprep.subr.mxu0 0.0
        %394 = vmatpush1.msra.mxu0 0.0
        %395 = vmatprep.subr.mxu0 0.0
        %396 = vmatpush1.msra.mxu0 0.0
        %397 = vmatprep.subr.mxu0 0.0
        %398 = vmatpush1.msra.mxu0 0.0
        %399 = vmatprep.subr.mxu0 0.0
        %400 = vmatpush1.msra.mxu0 0.0
        %401 = vmatprep.mubr.f32.mxu0 0.0
        %402 = vmatmul.mubr.f32.gmra.mrb[0].mxu0 %v327
        %v403 = vpop.f32.mrb[0].mxu0
        %v404 = vadd.f32 %v316, %v403
        %v405 = vpop.f32.mrb[0].mxu0
        %v406 = vadd.f32 %v316, %v405
        %407 = vmatprep.mubr.f32.mxu0 0.0
        %408 = vmatmul.mubr.f32.gmra.mrb[0].mxu0 %v330
        %v409 = vpop.f32.mrb[0].mxu0
        %v410 = vadd.f32 %v321, %v409
        %v411 = vpop.f32.mrb[0].mxu0
        %v412 = vadd.f32 %v321, %v411
        %413 = vdwg.mxu0
        %v414 = vmax.f32 %v404, 0.0
        %v415 = vmax.f32 %v406, 0.0
        %v416 = vmax.f32 %v410, 0.0
        %v417 = vmax.f32 %v412, 0.0
        %v418 = vld [vmem:[%s3] sm:$0xff]
        %v419 = vld [vmem:[%s3 + $0x8] sm:$0xff]
        %v420 = vld [vmem:[%s4] sm:$0xff]
        %v421 = vld [vmem:[%s4 + $0x8] sm:$0xff]
        %423 = vset.pattern.permute.xlu0 0
        %424 = vperm.xlu0 %423, %v420
        %v425 = vpop.permute.xlu0 %424
        %428 = vset.pattern.permute.xlu0 0
        %429 = vperm.xlu0 %428, %v421
        %v430 = vpop.permute.xlu0 %429
        %vm432 = vcmask 130048
        %v434 = vsel %vm432, %v418, 0
        %v437 = vsel %vm432, %v419, 0
        %439 = vmatprep.subr.mxu0 %v415
        %440 = vmatpush1.msra.mxu0 %v414
        %441 = vmatprep.subr.mxu0 %v417
        %442 = vmatpush1.msra.mxu0 %v416
        %443 = vmatprep.subr.mxu0 0.0
        %444 = vmatpush1.msra.mxu0 0.0
        %445 = vmatprep.subr.mxu0 0.0
        %446 = vmatpush1.msra.mxu0 0.0
        %447 = vmatprep.subr.mxu0 0.0
        %448 = vmatpush1.msra.mxu0 0.0
        %449 = vmatprep.subr.mxu0 0.0
        %450 = vmatpush1.msra.mxu0 0.0
        %451 = vmatprep.subr.mxu0 0.0
        %452 = vmatpush1.msra.mxu0 0.0
        %453 = vmatprep.subr.mxu0 0.0
        %454 = vmatpush1.msra.mxu0 0.0
        %455 = vmatprep.subr.mxu0 0.0
        %456 = vmatpush1.msra.mxu0 0.0
        %457 = vmatprep.subr.mxu0 0.0
        %458 = vmatpush1.msra.mxu0 0.0
        %459 = vmatprep.subr.mxu0 0.0
        %460 = vmatpush1.msra.mxu0 0.0
        %461 = vmatprep.subr.mxu0 0.0
        %462 = vmatpush1.msra.mxu0 0.0
        %463 = vmatprep.subr.mxu0 0.0
        %464 = vmatpush1.msra.mxu0 0.0
        %465 = vmatprep.subr.mxu0 0.0
        %466 = vmatpush1.msra.mxu0 0.0
        %467 = vmatprep.subr.mxu0 0.0
        %468 = vmatpush1.msra.mxu0 0.0
        %469 = vmatprep.subr.mxu0 0.0
        %470 = vmatpush1.msra.mxu0 0.0
        %471 = vmatprep.subr.mxu0 0.0
        %472 = vmatpush1.msra.mxu0 0.0
        %473 = vmatprep.subr.mxu0 0.0
        %474 = vmatpush1.msra.mxu0 0.0
        %475 = vmatprep.subr.mxu0 0.0
        %476 = vmatpush1.msra.mxu0 0.0
        %477 = vmatprep.subr.mxu0 0.0
        %478 = vmatpush1.msra.mxu0 0.0
        %479 = vmatprep.subr.mxu0 0.0
        %480 = vmatpush1.msra.mxu0 0.0
        %481 = vmatprep.subr.mxu0 0.0
        %482 = vmatpush1.msra.mxu0 0.0
        %483 = vmatprep.subr.mxu0 0.0
        %484 = vmatpush1.msra.mxu0 0.0
        %485 = vmatprep.subr.mxu0 0.0
        %486 = vmatpush1.msra.mxu0 0.0
        %487 = vmatprep.subr.mxu0 0.0
        %488 = vmatpush1.msra.mxu0 0.0
        %489 = vmatprep.subr.mxu0 0.0
        %490 = vmatpush1.msra.mxu0 0.0
        %491 = vmatprep.subr.mxu0 0.0
        %492 = vmatpush1.msra.mxu0 0.0
        %493 = vmatprep.subr.mxu0 0.0
        %494 = vmatpush1.msra.mxu0 0.0
        %495 = vmatprep.subr.mxu0 0.0
        %496 = vmatpush1.msra.mxu0 0.0
        %497 = vmatprep.subr.mxu0 0.0
        %498 = vmatpush1.msra.mxu0 0.0
        %499 = vmatprep.subr.mxu0 0.0
        %500 = vmatpush1.msra.mxu0 0.0
        %501 = vmatprep.subr.mxu0 0.0
        %502 = vmatpush1.msra.mxu0 0.0
        %503 = vmatprep.mubr.f32.mxu0 0.0
        %504 = vmatmul.mubr.f32.gmra.mrb[0].mxu0 %v434
        %v505 = vpop.f32.mrb[0].mxu0
        %v506 = vadd.f32 %v425, %v505
        %v507 = vpop.f32.mrb[0].mxu0
        %v508 = vadd.f32 %v425, %v507
        %509 = vmatprep.mubr.f32.mxu0 0.0
        %510 = vmatmul.mubr.f32.gmra.mrb[0].mxu0 %v437
        %v511 = vpop.f32.mrb[0].mxu0
        %v512 = vadd.f32 %v430, %v511
        %v513 = vpop.f32.mrb[0].mxu0
        %v514 = vadd.f32 %v430, %v513
        %515 = vdwg.mxu0
        %v516 = vmax.f32 %v506, 0.0
        %v517 = vmax.f32 %v508, 0.0
        %v518 = vmax.f32 %v512, 0.0
        %v519 = vmax.f32 %v514, 0.0
        %v520 = vld [vmem:[%s5] sm:$0xff]
        %v521 = vld [vmem:[%s5 + $0x8] sm:$0xff]
        %v522 = vld [vmem:[%s6] sm:$0xff]
        %v523 = vld [vmem:[%s6 + $0x8] sm:$0xff]
        %525 = vset.pattern.permute.xlu0 0
        %526 = vperm.xlu0 %525, %v522
        %v527 = vpop.permute.xlu0 %526
        %530 = vset.pattern.permute.xlu0 0
        %531 = vperm.xlu0 %530, %v523
        %v532 = vpop.permute.xlu0 %531
        %v535 = vsel %vm432, %v520, 0
        %v538 = vsel %vm432, %v521, 0
        %540 = vmatprep.subr.mxu0 %v517
        %541 = vmatpush1.msra.mxu0 %v516
        %542 = vmatprep.subr.mxu0 %v519
        %543 = vmatpush1.msra.mxu0 %v518
        %544 = vmatprep.subr.mxu0 0.0
        %545 = vmatpush1.msra.mxu0 0.0
        %546 = vmatprep.subr.mxu0 0.0
        %547 = vmatpush1.msra.mxu0 0.0
        %548 = vmatprep.subr.mxu0 0.0
        %549 = vmatpush1.msra.mxu0 0.0
        %550 = vmatprep.subr.mxu0 0.0
        %551 = vmatpush1.msra.mxu0 0.0
        %552 = vmatprep.subr.mxu0 0.0
        %553 = vmatpush1.msra.mxu0 0.0
        %554 = vmatprep.subr.mxu0 0.0
        %555 = vmatpush1.msra.mxu0 0.0
        %556 = vmatprep.subr.mxu0 0.0
        %557 = vmatpush1.msra.mxu0 0.0
        %558 = vmatprep.subr.mxu0 0.0
        %559 = vmatpush1.msra.mxu0 0.0
        %560 = vmatprep.subr.mxu0 0.0
        %561 = vmatpush1.msra.mxu0 0.0
        %562 = vmatprep.subr.mxu0 0.0
        %563 = vmatpush1.msra.mxu0 0.0
        %564 = vmatprep.subr.mxu0 0.0
        %565 = vmatpush1.msra.mxu0 0.0
        %566 = vmatprep.subr.mxu0 0.0
        %567 = vmatpush1.msra.mxu0 0.0
        %568 = vmatprep.subr.mxu0 0.0
        %569 = vmatpush1.msra.mxu0 0.0
        %570 = vmatprep.subr.mxu0 0.0
        %571 = vmatpush1.msra.mxu0 0.0
        %572 = vmatprep.subr.mxu0 0.0
        %573 = vmatpush1.msra.mxu0 0.0
        %574 = vmatprep.subr.mxu0 0.0
        %575 = vmatpush1.msra.mxu0 0.0
        %576 = vmatprep.subr.mxu0 0.0
        %577 = vmatpush1.msra.mxu0 0.0
        %578 = vmatprep.subr.mxu0 0.0
        %579 = vmatpush1.msra.mxu0 0.0
        %580 = vmatprep.subr.mxu0 0.0
        %581 = vmatpush1.msra.mxu0 0.0
        %582 = vmatprep.subr.mxu0 0.0
        %583 = vmatpush1.msra.mxu0 0.0
        %584 = vmatprep.subr.mxu0 0.0
        %585 = vmatpush1.msra.mxu0 0.0
        %586 = vmatprep.subr.mxu0 0.0
        %587 = vmatpush1.msra.mxu0 0.0
        %588 = vmatprep.subr.mxu0 0.0
        %589 = vmatpush1.msra.mxu0 0.0
        %590 = vmatprep.subr.mxu0 0.0
        %591 = vmatpush1.msra.mxu0 0.0
        %592 = vmatprep.subr.mxu0 0.0
        %593 = vmatpush1.msra.mxu0 0.0
        %594 = vmatprep.subr.mxu0 0.0
        %595 = vmatpush1.msra.mxu0 0.0
        %596 = vmatprep.subr.mxu0 0.0
        %597 = vmatpush1.msra.mxu0 0.0
        %598 = vmatprep.subr.mxu0 0.0
        %599 = vmatpush1.msra.mxu0 0.0
        %600 = vmatprep.subr.mxu0 0.0
        %601 = vmatpush1.msra.mxu0 0.0
        %602 = vmatprep.subr.mxu0 0.0
        %603 = vmatpush1.msra.mxu0 0.0
        %604 = vmatprep.mubr.f32.mxu0 0.0
        %605 = vmatmul.mubr.f32.gmra.mrb[0].mxu0 %v535
        %v606 = vpop.f32.mrb[0].mxu0
        %v607 = vadd.f32 %v527, %v606
        %v608 = vpop.f32.mrb[0].mxu0
        %v609 = vadd.f32 %v527, %v608
        %610 = vmatprep.mubr.f32.mxu0 0.0
        %611 = vmatmul.mubr.f32.gmra.mrb[0].mxu0 %v538
        %v612 = vpop.f32.mrb[0].mxu0
        %v613 = vadd.f32 %v532, %v612
        %v614 = vpop.f32.mrb[0].mxu0
        %v615 = vadd.f32 %v532, %v614
        %616 = vdwg.mxu0
        %v617 = vmax.f32 %v607, 0.0
        %v618 = vmax.f32 %v609, 0.0
        %v619 = vmax.f32 %v613, 0.0
        %v620 = vmax.f32 %v615, 0.0
        %621 = vst [vmem:[%s296] sm:$0xff] %v617
        %622 = vst [vmem:[%s296 + $0x8] sm:$0xff] %v618
        %623 = vst [vmem:[%s296 + $0x10] sm:$0xff] %v619
        %624 = vst [vmem:[%s296 + $0x18] sm:$0xff] %v620
        %s625 = sand.u32 %s197, 1
        %s626 = scalar_lea.sflag [#allocation3], %s625
        %s627 = sand.u32 %s197, 1
        %s628 = smul.addr %s627, 32
        %s629 = scalar_lea.vmem [#allocation2], %s628
        // Predicated region
        $region49: #{tpu_custom_call.1} parent=47 // pred_check
          %p630 = pneg %p207
        $region50: #{tpu_custom_call.1} parent=47 // pred_check_branch
          %632 = sbr.rel (%p630) target = $region52
        $region51: #{tpu_custom_call.1} parent=47 // pred_region
          %s633 = smul.u32 2, %s26
          %s635 = ssub.s32 512, 512
          %636 = vsyncadd %s626, %s635
          %s637 = smul.addr %s25, 4
          %s638 = sadd.s32 %s633, %s637
          %s639 = smul.addr %s638, 128
          %s640 = scalar_lea.hbm %s7, %s639
          %s641 = sshll.u32 %s629, 4
          %s642 = int_to_ptr.vmem [resolvable:$true] %s641
          %647 = dma.vmem_to_hbm [thread:$0]  %s642, 512, %s640, %s626, 256, 256, 16
        $region52: #{tpu_custom_call.1} parent=47 // pred_fallthru
          _
      $region48: #{tpu_custom_call.1} parent=5 // pred_fallthru
        _
      %p648 = scmp.le.s32.totalorder 2, %s16
      // Predicated region
      $region53: #{tpu_custom_call.1} parent=5 // pred_check
        %p649 = pneg %p648
      $region54: #{tpu_custom_call.1} parent=5 // pred_check_branch
        %651 = sbr.rel (%p649) target = $region56
      $region55: #{tpu_custom_call.1} parent=5 // pred_region
        %s652 = ssub.s32 %s16, 2
        // Predicated region
        $region57: #{tpu_custom_call.1} parent=55 // pred_check
          %p653 = pneg %p213
        $region58: #{tpu_custom_call.1} parent=55 // pred_check_branch
          %655 = sbr.rel (%p653) target = $region60
        $region59: #{tpu_custom_call.1} parent=55 // pred_region
          %s656 = sand.u32 %s198, 1
          %s657 = scalar_lea.sflag [#allocation3], %s656
          %s658 = sand.u32 %s198, 1
          %s659 = smul.addr %s658, 32
          %s660 = scalar_lea.vmem [#allocation2], %s659
          %661 = dma.done %s657, 512
        $region60: #{tpu_custom_call.1} parent=55 // pred_fallthru
          _
      $region56: #{tpu_custom_call.1} parent=5 // pred_fallthru
        _
    $region6: #{tpu_custom_call.1} parent=1 // loop_footer
      %s20 = sadd.s32 1, %s16
    $region7: #{tpu_custom_call.1} parent=1 // loop_footer_branch
      %15 = sbr.rel target = $region3
    $region8: #{tpu_custom_call.1} parent=1 // loop_exit
      _
    %662 = vsyncpa [#allocation3], 1
    %s663 = scalar_lea.sflag [#allocation3], 1
    %664 = vsyncpa %s663, 1

</llo_original>
